<compile_context>
chip_gen: v5e
topology: v5e:2x2
jax: 0.10.0
libtpu: 0.0.40
codegen_flags: <defaults>
</compile_context>

<pallas_src>
import functools

import jax
import jax.numpy as jnp
from jax.experimental import pallas as pl
from jax.experimental.pallas import tpu as pltpu


def _round_up(x, m):
    return ((x + m - 1) // m) * m


def _contrastive_kernel(fea_ref, pos_ref, neg_ref, out_ref, *, inv_tao, batch, tb):
    """One batch-tile: emits the partial (masked) sum of per-row losses."""
    i = pl.program_id(0)

    fea = fea_ref[...].astype(jnp.float32)
    pos = pos_ref[...].astype(jnp.float32)
    neg = neg_ref[...].astype(jnp.float32)

    # Fused F.normalize(dim=1) + CosineSimilarity(dim=-1):
    #   sim(a, b) = <a, b> * rsqrt(max(||a||^2, eps^2)) * rsqrt(max(||b||^2, eps^2))
    # eps^2 = (1e-12)^2 matches F.normalize's clamp on the norm.
    eps_sq = 1e-24
    ss_f = jnp.sum(fea * fea, axis=1, keepdims=True)   # [TB, 1]
    ss_p = jnp.sum(pos * pos, axis=1, keepdims=True)
    ss_n = jnp.sum(neg * neg, axis=1, keepdims=True)
    inv_f = jax.lax.rsqrt(jnp.maximum(ss_f, eps_sq))
    inv_p = jax.lax.rsqrt(jnp.maximum(ss_p, eps_sq))
    inv_n = jax.lax.rsqrt(jnp.maximum(ss_n, eps_sq))

    dot_p = jnp.sum(fea * pos, axis=1, keepdims=True)  # [TB, 1]
    dot_n = jnp.sum(fea * neg, axis=1, keepdims=True)

    pos_sim = dot_p * inv_f * inv_p
    neg_sim = dot_n * inv_f * inv_n

    # loss = -log(exp(ps/t) / (exp(ps/t) + exp(ns/t))) = log1p(exp((ns - ps)/t))
    loss = jnp.log1p(jnp.exp((neg_sim - pos_sim) * inv_tao))   # [TB, 1]

    # Mask rows past the true batch (padded tile at the tail of the grid).
    row = i * tb + jax.lax.broadcasted_iota(jnp.int32, (tb, 1), 0)
    partial = jnp.sum(jnp.where(row < batch, loss, 0.0))

    out_ref[...] = jnp.reshape(partial, (1, 1))


def contrastive_loss(fea, pos_fea, neg_fea, tao=1.0):
    """Pallas equivalent of Contrastive_loss(tao).forward(fea, pos_fea, neg_fea)."""
    assert fea.shape == pos_fea.shape == neg_fea.shape
    B, D = fea.shape

    # Batch tile: multiple of 8 (f32 sublane); capped so 3 inputs x 2 buffers
    # x TB x D x 4B stays far below the v7x scoped-VMEM limit.
    TB = min(512, _round_up(B, 8))
    num_blocks = pl.cdiv(B, TB)

    kernel = functools.partial(
        _contrastive_kernel, inv_tao=1.0 / float(tao), batch=B, tb=TB)

    partials = pl.pallas_call(
        kernel,
        out_shape=jax.ShapeDtypeStruct((num_blocks, 1), jnp.float32),
        grid=(num_blocks,),
        in_specs=[
            pl.BlockSpec((TB, D), lambda i: (i, 0)),
            pl.BlockSpec((TB, D), lambda i: (i, 0)),
            pl.BlockSpec((TB, D), lambda i: (i, 0)),
        ],
        out_specs=pl.BlockSpec((1, 1), lambda i: (i, 0)),
        compiler_params=pltpu.CompilerParams(
            dimension_semantics=("parallel",)),
    )(fea, pos_fea, neg_fea)

    return jnp.sum(partials) * (1.0 / B)


def _reference(fea, pos, neg, tao=1.0):
    """Plain-JAX mirror of the PyTorch module (incl. redundant renorm)."""
    def nrm(x):
        return x / jnp.maximum(jnp.linalg.norm(x, axis=1, keepdims=True), 1e-12)

    f, p, n = nrm(fea), nrm(pos), nrm(neg)

    def cs(a, b):
        return jnp.sum(a * b, -1) / jnp.maximum(
            jnp.linalg.norm(a, axis=-1) * jnp.linalg.norm(b, axis=-1), 1e-8)

    ps, ns = cs(f, p), cs(f, n)
    logits = jnp.exp(ps / tao) / (jnp.exp(ps / tao) + jnp.exp(ns / tao))
    return jnp.mean(-jnp.log(logits))


if __name__ == "__main__":
    key = jax.random.PRNGKey(0)
    k1, k2, k3 = jax.random.split(key, 3)

    # Demo shape consistent with the module (batch of hidden features).
    B, D = 8, 32
    fea = jax.random.normal(k1, (B, D), dtype=jnp.float32)
    pos_fea = jax.random.normal(k2, (B, D), dtype=jnp.float32)
    neg_fea = jax.random.normal(k3, (B, D), dtype=jnp.float32)

    loss = contrastive_loss(fea, pos_fea, neg_fea, tao=1.0)
    jax.block_until_ready(loss)
    expected = _reference(fea, pos_fea, neg_fea, tao=1.0)
    assert jnp.allclose(loss, expected, atol=1e-5, rtol=1e-5), (loss, expected)

    # Second check: batch not a multiple of the sublane tile (exercises mask).
    B2 = 13
    k4, k5, k6 = jax.random.split(k3, 3)
    fea2 = jax.random.normal(k4, (B2, D), dtype=jnp.float32)
    pos2 = jax.random.normal(k5, (B2, D), dtype=jnp.float32)
    neg2 = jax.random.normal(k6, (B2, D), dtype=jnp.float32)
    loss2 = contrastive_loss(fea2, pos2, neg2, tao=0.5)
    jax.block_until_ready(loss2)
    expected2 = _reference(fea2, pos2, neg2, tao=0.5)
    assert jnp.allclose(loss2, expected2, atol=1e-5, rtol=1e-5), (loss2, expected2)

    print("KERNEL_OK")
</pallas_src>

<mosaic_0001>
module attributes {stable_mosaic.version = 11 : i64} {
  func.func @_contrastive_kernel(%arg0: i32, %arg1: memref<8x32xf32, #tpu.memory_space<vmem>>, %arg2: memref<8x32xf32, #tpu.memory_space<vmem>>, %arg3: memref<8x32xf32, #tpu.memory_space<vmem>>, %arg4: memref<1x1xf32, #tpu.memory_space<vmem>>) attributes {dimension_semantics = [#tpu.dimension_semantics<parallel>], iteration_bounds = array<i64: 1>, scalar_prefetch = 0 : i64, scratch_operands = 0 : i64, tpu.core_type = #tpu.core_type<tc>, window_params = [{transform_indices = @transform_0, window_bounds = array<i64: 8, 32>}, {transform_indices = @transform_1, window_bounds = array<i64: 8, 32>}, {transform_indices = @transform_2, window_bounds = array<i64: 8, 32>}, {transform_indices = @transform_3, window_bounds = array<i64: 1, 1>}]} {
    %c0 = arith.constant 0 : index
    %c0_0 = arith.constant 0 : index
    %0 = vector.load %arg1[%c0, %c0_0] : memref<8x32xf32, #tpu.memory_space<vmem>>, vector<8x32xf32>
    %c0_1 = arith.constant 0 : index
    %c0_2 = arith.constant 0 : index
    %1 = vector.load %arg2[%c0_1, %c0_2] : memref<8x32xf32, #tpu.memory_space<vmem>>, vector<8x32xf32>
    %c0_3 = arith.constant 0 : index
    %c0_4 = arith.constant 0 : index
    %2 = vector.load %arg3[%c0_3, %c0_4] : memref<8x32xf32, #tpu.memory_space<vmem>>, vector<8x32xf32>
    %3 = arith.mulf %0, %0 : vector<8x32xf32>
    %cst = arith.constant dense<0.000000e+00> : vector<8xf32>
    %4 = vector.multi_reduction <add>, %3, %cst [1] : vector<8x32xf32> to vector<8xf32>
    %5 = vector.shape_cast %4 : vector<8xf32> to vector<8x1xf32>
    %6 = arith.mulf %1, %1 : vector<8x32xf32>
    %cst_5 = arith.constant dense<0.000000e+00> : vector<8xf32>
    %7 = vector.multi_reduction <add>, %6, %cst_5 [1] : vector<8x32xf32> to vector<8xf32>
    %8 = vector.shape_cast %7 : vector<8xf32> to vector<8x1xf32>
    %9 = arith.mulf %2, %2 : vector<8x32xf32>
    %cst_6 = arith.constant dense<0.000000e+00> : vector<8xf32>
    %10 = vector.multi_reduction <add>, %9, %cst_6 [1] : vector<8x32xf32> to vector<8xf32>
    %11 = vector.shape_cast %10 : vector<8xf32> to vector<8x1xf32>
    %cst_7 = arith.constant 1.000000e-24 : f32
    %12 = vector.broadcast %cst_7 : f32 to vector<8x1xf32>
    %13 = arith.maximumf %5, %12 : vector<8x1xf32>
    %14 = math.rsqrt %13 : vector<8x1xf32>
    %cst_8 = arith.constant 1.000000e-24 : f32
    %15 = vector.broadcast %cst_8 : f32 to vector<8x1xf32>
    %16 = arith.maximumf %8, %15 : vector<8x1xf32>
    %17 = math.rsqrt %16 : vector<8x1xf32>
    %cst_9 = arith.constant 1.000000e-24 : f32
    %18 = vector.broadcast %cst_9 : f32 to vector<8x1xf32>
    %19 = arith.maximumf %11, %18 : vector<8x1xf32>
    %20 = math.rsqrt %19 : vector<8x1xf32>
    %21 = arith.mulf %0, %1 : vector<8x32xf32>
    %cst_10 = arith.constant dense<0.000000e+00> : vector<8xf32>
    %22 = vector.multi_reduction <add>, %21, %cst_10 [1] : vector<8x32xf32> to vector<8xf32>
    %23 = vector.shape_cast %22 : vector<8xf32> to vector<8x1xf32>
    %24 = arith.mulf %0, %2 : vector<8x32xf32>
    %cst_11 = arith.constant dense<0.000000e+00> : vector<8xf32>
    %25 = vector.multi_reduction <add>, %24, %cst_11 [1] : vector<8x32xf32> to vector<8xf32>
    %26 = vector.shape_cast %25 : vector<8xf32> to vector<8x1xf32>
    %27 = arith.mulf %23, %14 : vector<8x1xf32>
    %28 = arith.mulf %27, %17 : vector<8x1xf32>
    %29 = arith.mulf %26, %14 : vector<8x1xf32>
    %30 = arith.mulf %29, %20 : vector<8x1xf32>
    %31 = arith.subf %30, %28 : vector<8x1xf32>
    %cst_12 = arith.constant 1.000000e+00 : f32
    %32 = vector.broadcast %cst_12 : f32 to vector<8x1xf32>
    %33 = arith.mulf %31, %32 : vector<8x1xf32>
    %34 = math.exp %33 : vector<8x1xf32>
    %35 = math.log1p %34 : vector<8x1xf32>
    %c8_i32 = arith.constant 8 : i32
    %36 = arith.muli %arg0, %c8_i32 : i32
    %37 = tpu.iota {dimensions = array<i32: 0>} : vector<8x1xi32>
    %38 = vector.broadcast %36 : i32 to vector<8x1xi32>
    %39 = arith.addi %38, %37 : vector<8x1xi32>
    %c8_i32_13 = arith.constant 8 : i32
    %40 = vector.broadcast %c8_i32_13 : i32 to vector<8x1xi32>
    %41 = arith.cmpi slt, %39, %40 : vector<8x1xi32>
    %cst_14 = arith.constant 0.000000e+00 : f32
    %42 = vector.broadcast %cst_14 : f32 to vector<8x1xf32>
    %43 = arith.select %41, %35, %42 : vector<8x1xi1>, vector<8x1xf32>
    %44 = vector.shape_cast %43 : vector<8x1xf32> to vector<1x8x1xf32>
    %cst_15 = arith.constant dense<0.000000e+00> : vector<1xf32>
    %45 = vector.multi_reduction <add>, %44, %cst_15 [1, 2] : vector<1x8x1xf32> to vector<1xf32>
    %46 = vector.shape_cast %45 : vector<1xf32> to vector<1x1x1xf32>
    %47 = vector.extract %46[0, 0, 0] : f32 from vector<1x1x1xf32>
    %48 = vector.broadcast %47 : f32 to vector<1x1xf32>
    %c0_16 = arith.constant 0 : index
    %c0_17 = arith.constant 0 : index
    %49 = vector.load %arg4[%c0_16, %c0_17] : memref<1x1xf32, #tpu.memory_space<vmem>>, vector<1x1xf32>
    tpu.vector_store %arg4[%c0_16, %c0_17], %48 {strides = array<i32>} : memref<1x1xf32, #tpu.memory_space<vmem>>, vector<1x1xf32>,
    return
  }
  func.func @transform_0(%arg0: i32) -> (i32, i32) {
    %c0_i32 = arith.constant 0 : i32
    %c0_i32_0 = arith.constant 0 : i32
    return %arg0, %c0_i32 : i32, i32
  }
  func.func @transform_1(%arg0: i32) -> (i32, i32) {
    %c0_i32 = arith.constant 0 : i32
    %c0_i32_0 = arith.constant 0 : i32
    return %arg0, %c0_i32 : i32, i32
  }
  func.func @transform_2(%arg0: i32) -> (i32, i32) {
    %c0_i32 = arith.constant 0 : i32
    %c0_i32_0 = arith.constant 0 : i32
    return %arg0, %c0_i32 : i32, i32
  }
  func.func @transform_3(%arg0: i32) -> (i32, i32) {
    %c0_i32 = arith.constant 0 : i32
    %c0_i32_0 = arith.constant 0 : i32
    return %arg0, %c0_i32 : i32, i32
  }
}

</mosaic_0001>

<llo_original>
// kernel: tpu_custom_call.1
$region0: #{tpu_custom_call.1}
  #allocation0 [shape = 'u32[]', space=smem, size = 0x4, offset = 0x4, fixed_abs, tag = 'smem constant byte address 0x4 - core index']
  #allocation1 [shape = 'u32[72,128]{1,0:T(1,128)}', space=vmem, size = 0x9000, scoped, tag = 'internal scratch']
  %s0 = inlined_call_operand.hbm [shape: f32[8,32], index: 0, kind: input, shape index: {}]
  %s1 = inlined_call_operand.hbm [shape: f32[8,32], index: 1, kind: input, shape index: {}]
  %s2 = inlined_call_operand.hbm [shape: f32[8,32], index: 2, kind: input, shape index: {}]
  %s3 = inlined_call_operand.hbm [shape: f32[1,1], index: 3, kind: output, shape index: {}]
  %s4 = sld [smem:[#allocation0]]
  $region34: #{tpu_custom_call.1} parent=0
    _
  %s6 = ssub.s32 1, %s4
  %s7 = scalar_select 0, %s6, %s4
  $region1: #{tpu_custom_call.1} parent=0
    #allocation2 [shape = 'u8[4096]{0}', space=vmem, size = 0x1000, scoped, tag = 'input window, operand 0, single buffered']
    #allocation3 [shape = 's32[1]{0}', space=sflag, size = 0x4, scoped, tag = 'scoped memory for tpu_custom_call.1']
    #allocation4 [shape = 's32[1]{0}', space=sflag, size = 0x4, scoped, tag = 'scoped memory for tpu_custom_call.1']
    #allocation5 [shape = 'u8[4096]{0}', space=vmem, size = 0x1000, scoped, tag = 'input window, operand 1, single buffered']
    #allocation6 [shape = 's32[1]{0}', space=sflag, size = 0x4, scoped, tag = 'scoped memory for tpu_custom_call.1']
    #allocation7 [shape = 'u8[4096]{0}', space=vmem, size = 0x1000, scoped, tag = 'input window, operand 2, single buffered']
    #allocation8 [shape = 'u8[512]{0}', space=vmem, size = 0x400, scoped, tag = 'output window, operand 0, single buffered']
    %8 = vsyncpa [#allocation3], 0
    %9 = vsyncpa [#allocation6], 0
    %10 = vsyncpa [#allocation4], 0
    // Predicated region
    $region2: #{tpu_custom_call.1} parent=1 // pred_check
      _
    $region3: #{tpu_custom_call.1} parent=1 // pred_check_branch
      %12 = sbr.rel (0) target = $region5
    $region4: #{tpu_custom_call.1} parent=1 // pred_region
      %14 = vsyncadd [#allocation3], 0
      %s16 = sshll.u32 %s0, 4
      %s17 = int_to_ptr.hbm [resolvable:$true] %s16
      %s18 = sshll.u32 [#allocation2], 4
      %s19 = int_to_ptr.vmem [resolvable:$true] %s18
      %21 = dma.hbm_to_vmem [thread:$0]  %s17, 128, %s19, [#allocation3]
    $region5: #{tpu_custom_call.1} parent=1 // pred_fallthru
      _
    // Predicated region
    $region6: #{tpu_custom_call.1} parent=1 // pred_check
      _
    $region7: #{tpu_custom_call.1} parent=1 // pred_check_branch
      %23 = sbr.rel (0) target = $region9
    $region8: #{tpu_custom_call.1} parent=1 // pred_region
      %25 = vsyncadd [#allocation6], 0
      %s27 = sshll.u32 %s1, 4
      %s28 = int_to_ptr.hbm [resolvable:$true] %s27
      %s29 = sshll.u32 [#allocation5], 4
      %s30 = int_to_ptr.vmem [resolvable:$true] %s29
      %32 = dma.hbm_to_vmem [thread:$0]  %s28, 128, %s30, [#allocation6]
    $region9: #{tpu_custom_call.1} parent=1 // pred_fallthru
      _
    // Predicated region
    $region10: #{tpu_custom_call.1} parent=1 // pred_check
      _
    $region11: #{tpu_custom_call.1} parent=1 // pred_check_branch
      %34 = sbr.rel (0) target = $region13
    $region12: #{tpu_custom_call.1} parent=1 // pred_region
      %36 = vsyncadd [#allocation6], 0
      %s38 = sshll.u32 %s2, 4
      %s39 = int_to_ptr.hbm [resolvable:$true] %s38
      %s40 = sshll.u32 [#allocation7], 4
      %s41 = int_to_ptr.vmem [resolvable:$true] %s40
      %43 = dma.hbm_to_vmem [thread:$0]  %s39, 128, %s41, [#allocation6]
    $region13: #{tpu_custom_call.1} parent=1 // pred_fallthru
      _
    // Predicated region
    $region14: #{tpu_custom_call.1} parent=1 // pred_check
      _
    $region15: #{tpu_custom_call.1} parent=1 // pred_check_branch
      %45 = sbr.rel (0) target = $region17
    $region16: #{tpu_custom_call.1} parent=1 // pred_region
      %47 = dma.done [#allocation3], 128
    $region17: #{tpu_custom_call.1} parent=1 // pred_fallthru
      _
    // Predicated region
    $region18: #{tpu_custom_call.1} parent=1 // pred_check
      _
    $region19: #{tpu_custom_call.1} parent=1 // pred_check_branch
      %49 = sbr.rel (0) target = $region21
    $region20: #{tpu_custom_call.1} parent=1 // pred_region
      %51 = dma.done [#allocation6], 128
    $region21: #{tpu_custom_call.1} parent=1 // pred_fallthru
      _
    // Predicated region
    $region22: #{tpu_custom_call.1} parent=1 // pred_check
      _
    $region23: #{tpu_custom_call.1} parent=1 // pred_check_branch
      %53 = sbr.rel (0) target = $region25
    $region24: #{tpu_custom_call.1} parent=1 // pred_region
      %55 = dma.done [#allocation6], 128
    $region25: #{tpu_custom_call.1} parent=1 // pred_fallthru
      _
    %v56 = vld [vmem:[#allocation2] sm:$0xff]
    %v57 = vld [vmem:[#allocation5] sm:$0xff]
    %v58 = vld [vmem:[#allocation7] sm:$0xff]
    %v59 = vmul.f32 %v56, %v56
    %vm60 = vcmask 261120
    %v61 = vsel %vm60, %v59, 0.0
    %62 = vadd.xlane.f32.xlu0 %v61
    %v63 = vpop.xlane.xlu0 %62
    %v64 = vmul.f32 %v57, %v57
    %v65 = vsel %vm60, %v64, 0.0
    %66 = vadd.xlane.f32.xlu0 %v65
    %v67 = vpop.xlane.xlu0 %66
    %v68 = vmul.f32 %v58, %v58
    %v69 = vsel %vm60, %v68, 0.0
    %70 = vadd.xlane.f32.xlu0 %v69
    %v71 = vpop.xlane.xlu0 %70
    %v72 = vmax.f32 %v63, 1e-24
    %v73 = vrsqrt.pop %v72
    %v74 = vmul.f32 %v73, %v72
    %v75 = vmul.f32 %v74, %v73
    %v76 = vmul.f32 0.5, %v75
    %v77 = vsub.f32 1.5, %v76
    %v78 = vmul.f32 %v73, %v77
    %vm79 = vweird.f32 %v72
    %vm80 = vweird.f32 %v73
    %vm81 = vmor %vm79, %vm80
    %v82 = vsel %vm81, %v73, %v78
    %v83 = vmax.f32 %v67, 1e-24
    %v84 = vrsqrt.pop %v83
    %v85 = vmul.f32 %v84, %v83
    %v86 = vmul.f32 %v85, %v84
    %v87 = vmul.f32 0.5, %v86
    %v88 = vsub.f32 1.5, %v87
    %v89 = vmul.f32 %v84, %v88
    %vm90 = vweird.f32 %v83
    %vm91 = vweird.f32 %v84
    %vm92 = vmor %vm90, %vm91
    %v93 = vsel %vm92, %v84, %v89
    %v94 = vmax.f32 %v71, 1e-24
    %v95 = vrsqrt.pop %v94
    %v96 = vmul.f32 %v95, %v94
    %v97 = vmul.f32 %v96, %v95
    %v98 = vmul.f32 0.5, %v97
    %v99 = vsub.f32 1.5, %v98
    %v100 = vmul.f32 %v95, %v99
    %vm101 = vweird.f32 %v94
    %vm102 = vweird.f32 %v95
    %vm103 = vmor %vm101, %vm102
    %v104 = vsel %vm103, %v95, %v100
    %v105 = vmul.f32 %v56, %v57
    %v106 = vsel %vm60, %v105, 0.0
    %107 = vadd.xlane.f32.xlu0 %v106
    %v108 = vpop.xlane.xlu0 %107
    %v109 = vmul.f32 %v56, %v58
    %v110 = vsel %vm60, %v109, 0.0
    %111 = vadd.xlane.f32.xlu0 %v110
    %v112 = vpop.xlane.xlu0 %111
    %v113 = vmul.f32 %v108, %v82
    %v114 = vmul.f32 %v113, %v93
    %v115 = vmul.f32 %v112, %v82
    %v116 = vmul.f32 %v115, %v104
    %v117 = vsub.f32 %v116, %v114
    %v118 = vmul.f32 %v117, 1.442695
    %v119 = vpow.pop %v118
    %v120 = vadd.f32 %v119, 1.0
    %v121 = vlog2.pop %v120
    %v122 = vmul.f32 %v121, 0.6931472
    %v123 = vmul.f32 -0.5, %v119
    %v124 = vadd.f32 %v123, 1.0
    %v125 = vmul.f32 %v124, %v119
    %v126 = vand.u32 2147483647, %v119
    %vm127 = vcmp.lt.f32.partialorder %v126, 0.0004427343
    %v128 = vsel %vm127, %v125, %v122
    %s129 = smul.u32 0, 8
    %v130 = vlaneseq
    %v131 = vshrl.u32 %v130, 7
    %v132 = vstv %s129
    %v133 = vadd.s32 %v132, %v131
    %vm134 = vcmp.lt.s32.totalorder %v133, 8
    %v135 = vsel %vm134, %v128, 0.0
    %vm136 = vcmask 7168
    %v137 = vsel %vm136, %v135, 0.0
    %138 = vadd.xlane.f32.xlu0 %v137
    %v139 = vpop.xlane.xlu0 %138
    %v140 = vrot.slane %v139, 4
    %v141 = vadd.f32 %v139, %v140
    %v142 = vrot.slane %v141, 2
    %v143 = vadd.f32 %v141, %v142
    %v144 = vrot.slane %v143, 1
    %v145 = vadd.f32 %v143, %v144
    %s146 = vtos %v145
    %v147 = vstv %s146
    %vm148 = vcmask 0
    %149 = vst.msk [vmem:[#allocation8] sm:$0x1] %vm148, %v147
    // Predicated region
    $region26: #{tpu_custom_call.1} parent=1 // pred_check
      _
    $region27: #{tpu_custom_call.1} parent=1 // pred_check_branch
      %151 = sbr.rel (0) target = $region29
    $region28: #{tpu_custom_call.1} parent=1 // pred_region
      %153 = vsyncadd [#allocation4], 0
      %s155 = sshll.u32 [#allocation8], 4
      %s156 = int_to_ptr.vmem [resolvable:$true] %s155
      %s157 = sshll.u32 %s3, 4
      %s158 = int_to_ptr.hbm [resolvable:$true] %s157
      %160 = dma.vmem_to_hbm [thread:$0]  %s156, 16, %s158, [#allocation4]
    $region29: #{tpu_custom_call.1} parent=1 // pred_fallthru
      _
    // Predicated region
    $region30: #{tpu_custom_call.1} parent=1 // pred_check
      _
    $region31: #{tpu_custom_call.1} parent=1 // pred_check_branch
      %162 = sbr.rel (0) target = $region33
    $region32: #{tpu_custom_call.1} parent=1 // pred_region
      %164 = dma.done [#allocation4], 16
    $region33: #{tpu_custom_call.1} parent=1 // pred_fallthru
      _
    %165 = vsyncpa [#allocation3], 1
    %166 = vsyncpa [#allocation6], 1
    %167 = vsyncpa [#allocation4], 1

</llo_original>
